<compile_context>
chip_gen: v7x
topology: tpu7x:2x2x1
jax: 0.10.0
libtpu: 0.0.40
codegen_flags: <defaults>
</compile_context>

<pallas_src>
import jax
import jax.numpy as jnp
from jax.experimental import pallas as pl
from jax.experimental.pallas import tpu as pltpu


def _round_up(x, m):
    return (x + m - 1) // m * m


# ----------------------------------------------------------------------------
# Pallas kernel
# ----------------------------------------------------------------------------
def _layer_scale_kernel(x_ref, g_ref, o_ref):
    # (tm, tc) tile times a (1, tc) per-channel scale, broadcast over rows.
    # Cast x to the (possibly promoted) output dtype inside the kernel so the
    # HBM read stays in the input dtype.
    o_ref[...] = x_ref[...].astype(o_ref.dtype) * g_ref[...]


def layer_scale(x, gamma, *, target_block_bytes=4 << 20,
                min_row_tile=512, max_row_tile=1024, col_tile=2048):
    """y = x * gamma, gamma broadcast over all leading dims of x."""
    orig_shape = x.shape
    C = orig_shape[-1]
    assert gamma.shape == (C,), f"gamma shape {gamma.shape} != ({C},)"
    assert col_tile % 128 == 0

    # PyTorch-style type promotion (bf16 x * f32 gamma -> f32 result).
    out_dtype = jnp.result_type(x.dtype, gamma.dtype)

    x2 = x.reshape(-1, C)
    M = x2.shape[0]
    gamma_eff = gamma

    # Narrow channel dims: re-view as a lane-dense (M*C/128, 128) slab so the
    # output last dim is a full 128 lanes (unmasked vst), tiling gamma to
    # match.  Pure reshape of a contiguous array: no extra HBM traffic.
    if C < 128 and 128 % C == 0 and (M * C) % 128 == 0:
        reps = 128 // C
        x2 = x2.reshape((M * C) // 128, 128)
        gamma_eff = jnp.tile(gamma, reps)
        M, C = x2.shape

    # Channel tile: full channel dim when it fits (lane-dense, exact);
    # otherwise a fixed multiple-of-128 chunk with a masked cdiv edge block.
    tc = C if C <= col_tile else col_tile

    # Row tile: sized by bytes (~target_block_bytes per x block), multiple of
    # 8 sublanes, clamped so double-buffered in+out blocks stay far under
    # v7x's 64 MiB VMEM; never larger than the (rounded) row count.
    itemsize = jnp.dtype(x2.dtype).itemsize
    tm = _round_up(max(1, target_block_bytes // (tc * itemsize)), 8)
    tm = max(min_row_tile, min(tm, max_row_tile))
    tm = max(8, min(tm, _round_up(M, 8)))

    grid_m = pl.cdiv(M, tm)
    grid_c = pl.cdiv(C, tc)

    # v7x has 2 TensorCores: make sure a small problem still yields >= 2
    # parallel grid steps so one core does not idle.
    if grid_m * grid_c < 2 and M >= 16:
        tm = _round_up(pl.cdiv(M, 2), 8)
        grid_m = pl.cdiv(M, tm)

    g2 = gamma_eff.reshape(1, C).astype(out_dtype)

    # Channel axis is the OUTER grid axis so gamma's (1, tc) block is only
    # re-fetched when the channel chunk changes; rows are the inner axis.
    out = pl.pallas_call(
        _layer_scale_kernel,
        out_shape=jax.ShapeDtypeStruct((M, C), out_dtype),
        grid=(grid_c, grid_m),
        in_specs=[
            pl.BlockSpec((tm, tc), lambda j, i: (i, j)),
            pl.BlockSpec((1, tc), lambda j, i: (0, j)),
        ],
        out_specs=pl.BlockSpec((tm, tc), lambda j, i: (i, j)),
        compiler_params=pltpu.CompilerParams(
            dimension_semantics=("parallel", "parallel"),
        ),
    )(x2, g2)

    return out.reshape(orig_shape)


# ----------------------------------------------------------------------------
# Module wrapper (mirrors the PyTorch LayerScale)
# ----------------------------------------------------------------------------
def init_layer_scale_params(dim, init_values=1e-5):
    # PyTorch: self.gamma = nn.Parameter(init_values * torch.ones(dim))
    return {"gamma": jnp.full((dim,), init_values, jnp.float32)}


def layer_scale_forward(params, x):
    return layer_scale(x, params["gamma"])


# ----------------------------------------------------------------------------
if __name__ == "__main__":
    key = jax.random.PRNGKey(0)
    kx1, kx2, kx3, kg1, kg2 = jax.random.split(key, 5)

    fwd = jax.jit(layer_scale_forward)

    # --- Test 1: narrow channel dim (C < 128) -> lane-dense reshape path. ---
    dim1 = 32
    params1 = init_layer_scale_params(dim1, init_values=1e-5)
    params1["gamma"] = params1["gamma"] * (
        1.0 + jax.random.normal(kg1, (dim1,), jnp.float32))
    x1 = jax.random.normal(kx1, (2, 16, dim1), jnp.float32)
    y1 = jax.block_until_ready(fwd(params1, x1))
    ref1 = x1 * params1["gamma"]
    assert y1.shape == x1.shape and y1.dtype == ref1.dtype
    assert bool(jnp.all(jnp.isfinite(y1)))
    assert bool(jnp.allclose(y1, ref1, rtol=1e-6, atol=1e-6))

    # --- Test 2: C >= 128, bf16 input (promotes to f32 like PyTorch). -------
    dim2 = 256
    params2 = init_layer_scale_params(dim2, init_values=1e-5)
    params2["gamma"] = params2["gamma"] * (
        1.0 + jax.random.normal(kg2, (dim2,), jnp.float32))
    x2 = jax.random.normal(kx2, (2, 16, dim2), jnp.float32).astype(jnp.bfloat16)
    y2 = jax.block_until_ready(fwd(params2, x2))
    ref2 = x2.astype(jnp.float32) * params2["gamma"]
    assert y2.shape == x2.shape and y2.dtype == jnp.float32
    assert bool(jnp.allclose(y2, ref2, rtol=1e-6, atol=1e-6))

    # --- Test 3: row count not a multiple of the tile -> masked edge block. -
    x3 = jax.random.normal(kx3, (3, 10, dim2), jnp.float32)
    y3 = jax.block_until_ready(fwd(params2, x3))
    ref3 = x3 * params2["gamma"]
    assert y3.shape == x3.shape and y3.dtype == ref3.dtype
    assert bool(jnp.allclose(y3, ref3, rtol=1e-6, atol=1e-6))

    print("KERNEL_OK")
</pallas_src>

<mosaic_0001>
module attributes {stable_mosaic.version = 11 : i64} {
  func.func @_layer_scale_kernel(%arg0: i32, %arg1: i32, %arg2: memref<8x128xf32, #tpu.memory_space<vmem>>, %arg3: memref<1x128xf32, #tpu.memory_space<vmem>>, %arg4: memref<8x128xf32, #tpu.memory_space<vmem>>) attributes {dimension_semantics = [#tpu.dimension_semantics<parallel>, #tpu.dimension_semantics<parallel>], iteration_bounds = array<i64: 1, 1>, scalar_prefetch = 0 : i64, scratch_operands = 0 : i64, tpu.core_type = #tpu.core_type<tc>, window_params = [{transform_indices = @transform_0, window_bounds = array<i64: 8, 128>}, {transform_indices = @transform_1, window_bounds = array<i64: 1, 128>}, {transform_indices = @transform_2, window_bounds = array<i64: 8, 128>}]} {
    %c0 = arith.constant 0 : index
    %c0_0 = arith.constant 0 : index
    %0 = vector.load %arg2[%c0, %c0_0] : memref<8x128xf32, #tpu.memory_space<vmem>>, vector<8x128xf32>
    %c0_1 = arith.constant 0 : index
    %c0_2 = arith.constant 0 : index
    %1 = vector.load %arg3[%c0_1, %c0_2] : memref<1x128xf32, #tpu.memory_space<vmem>>, vector<1x128xf32>
    %2 = vector.broadcast %1 : vector<1x128xf32> to vector<8x128xf32>
    %3 = arith.mulf %0, %2 : vector<8x128xf32>
    %c0_3 = arith.constant 0 : index
    %c0_4 = arith.constant 0 : index
    %4 = vector.load %arg4[%c0_3, %c0_4] : memref<8x128xf32, #tpu.memory_space<vmem>>, vector<8x128xf32>
    tpu.vector_store %arg4[%c0_3, %c0_4], %3 {strides = array<i32>} : memref<8x128xf32, #tpu.memory_space<vmem>>, vector<8x128xf32>,
    return
  }
  func.func @transform_0(%arg0: i32, %arg1: i32) -> (i32, i32) {
    %c0_i32 = arith.constant 0 : i32
    return %arg1, %arg0 : i32, i32
  }
  func.func @transform_1(%arg0: i32, %arg1: i32) -> (i32, i32) {
    %c0_i32 = arith.constant 0 : i32
    %c0_i32_0 = arith.constant 0 : i32
    return %c0_i32, %arg0 : i32, i32
  }
  func.func @transform_2(%arg0: i32, %arg1: i32) -> (i32, i32) {
    %c0_i32 = arith.constant 0 : i32
    return %arg1, %arg0 : i32, i32
  }
}

</mosaic_0001>

<llo_original>
// kernel: tile.9
$region0: #{tile.9}
  %s0 = inlined_call_operand.vmem [shape: f32[4,32], index: 0, kind: input, shape index: {}]
  %s1 = inlined_call_operand.vmem [shape: f32[1,128], index: 1, kind: output, shape index: {}]
  $region1: #{tile.9} parent=0
    #allocation0 [shape = 'u8[4096]{0}', space=vmem, size = 0x1000, scoped, tag = 'scoped mem for output reshape']
    #allocation1 [shape = 'u8[4096]{0}', space=vmem, size = 0x1000, scoped, tag = 'scoped mem for input reshape']
    %s3 = sshllo.u32 0, 4
    %v4 = vld [vmem:[%s0] sm:%s3]
    %5 = vst [vmem:[#allocation1] sm:%s3] %v4
    %v6 = vld [vmem:[#allocation1] sm:$0x1]
    %vm7 = vcmask 261120
    %8 = vst.msk [vmem:[#allocation0] sm:$0x1] %vm7, %v6
    %s9 = scalar_lea.vmem [#allocation1], 3
    %v10 = vld [vmem:[%s9] sm:$0x1]
    %11 = vrot.lane.b32.xlu0 %v10, 96
    %v12 = vpop.permute.xlu0 %11
    %vm13 = vcmask 1048320
    %14 = vst.msk [vmem:[#allocation0] sm:$0x1] %vm13, %v12
    %s15 = scalar_lea.vmem [#allocation1], 2
    %v16 = vld [vmem:[%s15] sm:$0x1]
    %17 = vrot.lane.b32.xlu0 %v16, 64
    %v18 = vpop.permute.xlu0 %17
    %vm19 = vcmask 785920
    %20 = vst.msk [vmem:[#allocation0] sm:$0x1] %vm19, %v18
    %s21 = scalar_lea.vmem [#allocation1], 1
    %v22 = vld [vmem:[%s21] sm:$0x1]
    %23 = vrot.lane.b32.xlu0 %v22, 32
    %v24 = vpop.permute.xlu0 %23
    %vm25 = vcmask 523520
    %26 = vst.msk [vmem:[#allocation0] sm:$0x1] %vm25, %v24
    %s28 = sshllo.u32 0, 1
    %v30 = vld [vmem:[#allocation0] sm:%s28]
    %s31 = sshllo.u32 0, 1
    %32 = vst [vmem:[%s1] sm:%s31] %v30

// kernel: tile.8
$region0: #{tile.8}
  #allocation2 [shape = 's32[1]{0}', space=sflag, size = 0x4, scoped, tag = 'scoped memory for tile.8']
  %s0 = inlined_call_operand.hbm [shape: f32[32], index: 0, kind: input, shape index: {}]
  %s1 = inlined_call_operand.vmem [shape: f32[4,32], index: 1, kind: output, shape index: {}]
  $region1: #{tile.8} parent=0
    #allocation0 [shape = 'u8[512]{0}', space=vmem, size = 0x400, scoped, tag = 'operand span for operand 0']
    #allocation1 [shape = 's32[1]{0}', space=sflag, size = 0x4, scoped, tag = 'scoped memory for tile.8']
    %2 = vsyncpa [#allocation1], 0
    // Predicated region
    $region2: #{tile.8} parent=1 // pred_check
      _
    $region3: #{tile.8} parent=1 // pred_check_branch
      %4 = sbr.rel (0) target = $region5
    $region4: #{tile.8} parent=1 // pred_region
      %s6 = ssub.s32 16, 16
      %7 = vsyncadd [#allocation1], %s6
      %s9 = sshll.u32 [#allocation0], 4
      %s10 = int_to_ptr.vmem [resolvable:$true] %s9
      %12 = dma.hbm_to_vmem [thread:$0]  %s0, 16, %s10, [#allocation1]
    $region5: #{tile.8} parent=1 // pred_fallthru
      _
    // Predicated region
    $region6: #{tile.8} parent=1 // pred_check
      _
    $region7: #{tile.8} parent=1 // pred_check_branch
      %14 = sbr.rel (0) target = $region9
    $region8: #{tile.8} parent=1 // pred_region
      %15 = dma.done [#allocation1], 16
    $region9: #{tile.8} parent=1 // pred_fallthru
      _
    %v16 = vld [vmem:[#allocation0] ss:$0 sm:$0xff]
    %17 = vst [vmem:[%s1] sm:$0xf] %v16
    %18 = vsyncpa [#allocation1], 1

// kernel: layer_scale_forward.1
$region0: #{layer_scale_forward.1}
  #allocation0 [shape = 'u32[]', space=smem, size = 0x4, offset = 0x4, fixed_abs, tag = 'smem constant byte address 0x4 - core index']
  #allocation1 [shape = 'u32[144,128]{1,0:T(1,128)}', space=vmem, size = 0x12000, scoped, tag = 'internal scratch']
  %s0 = inlined_call_operand.vmem [shape: f32[8,128], index: 0, kind: input, shape index: {}]
  %s1 = inlined_call_operand.vmem [shape: f32[1,128], index: 1, kind: input, shape index: {}]
  %s2 = inlined_call_operand.vmem [shape: f32[8,128], index: 2, kind: output, shape index: {}]
  %s3 = sld [smem:[#allocation0]]
  $region18: #{layer_scale_forward.1} parent=0
    _
  %s5 = ssub.s32 1, %s3
  %s6 = scalar_select 0, %s5, %s3
  // Predicated region
  $region2: #{layer_scale_forward.1} parent=0 // pred_check
    _
  $region3: #{layer_scale_forward.1} parent=0 // pred_check_branch
    %8 = sbr.rel (0) target = $region5
  $region4: #{layer_scale_forward.1} parent=0 // pred_region
    _
  $region5: #{layer_scale_forward.1} parent=0 // pred_fallthru
    _
  // Predicated region
  $region6: #{layer_scale_forward.1} parent=0 // pred_check
    _
  $region7: #{layer_scale_forward.1} parent=0 // pred_check_branch
    %10 = sbr.rel (0) target = $region9
  $region8: #{layer_scale_forward.1} parent=0 // pred_region
    _
  $region9: #{layer_scale_forward.1} parent=0 // pred_fallthru
    _
  %v11 = vld [vmem:[%s0] sm:$0xff]
  %v12 = vld [vmem:[%s1] sm:$0x1]
  %v14 = vlaneseq
  %v15 = vshrl.u32 %v14, 7
  %v16 = vsub.s32 0, %v15
  %v17 = vrot.slane %v12, %v16
  %v19 = vmul.f32 %v11, %v17
  %20 = vst [vmem:[%s2] sm:$0xff] %v19
  // Predicated region
  $region10: #{layer_scale_forward.1} parent=0 // pred_check
    _
  $region11: #{layer_scale_forward.1} parent=0 // pred_check_branch
    %22 = sbr.rel (0) target = $region13
  $region12: #{layer_scale_forward.1} parent=0 // pred_region
    _
  $region13: #{layer_scale_forward.1} parent=0 // pred_fallthru
    _
  // Predicated region
  $region14: #{layer_scale_forward.1} parent=0 // pred_check
    _
  $region15: #{layer_scale_forward.1} parent=0 // pred_check_branch
    %24 = sbr.rel (0) target = $region17
  $region16: #{layer_scale_forward.1} parent=0 // pred_region
    _
  $region17: #{layer_scale_forward.1} parent=0 // pred_fallthru
    _

</llo_original>
